<compile_context>
chip_gen: v6e
topology: v6e:2x2x1
jax: 0.10.0
libtpu: 0.0.40
codegen_flags: <defaults>
</compile_context>

<pallas_src>
import functools

import jax
import jax.numpy as jnp
from jax.experimental import pallas as pl
from jax.experimental.pallas import tpu as pltpu

_MIB = 1024 * 1024
# Default tile caps (128-aligned).  Worst case (tm=512, tk=2048, tn=1024):
#   2*(x bf16 + w bf16 + out) + f32 acc  ~=  16-20 MiB  ->  fits every gen.
_TM_CAP = 512
_TN_CAP = 1024
_TK_CAP = 2048


def _round_up(x, m):
    return (x + m - 1) // m * m


def _padded_dim(d, cap):
    """Pad `d` to a 128 multiple so that a large divisor tile (<= cap) exists.

    Prefers no padding beyond the 128 round-up; allows at most ~12.5% extra
    padding only when it materially reduces the number of grid steps
    (e.g. 17*128 -> 2*1152 instead of 17 steps of 128)."""
    d128 = _round_up(d, 128)
    best_key, best_pad = None, d128
    for t in range(128, min(cap, d128) + 1, 128):
        padded = _round_up(d128, t)
        waste = padded - d128
        if waste > d128 // 8:
            continue
        key = (padded // t, waste)          # fewest steps, then least padding
        if best_key is None or key < best_key:
            best_key, best_pad = key, padded
    return best_pad


def _best_tile(dim, cap):
    """Largest 128-multiple divisor of `dim` (itself a 128 multiple) <= cap."""
    best = 128
    for t in range(128, min(cap, dim) + 1, 128):
        if dim % t == 0:
            best = t
    return best


# ----------------------------- kernels --------------------------------------


def _linear_kernel_single_k(x_ref, w_ref, b_ref, o_ref):
    # Single reduction step: no accumulator scratch, no extra VMEM round trip.
    acc = jnp.dot(x_ref[...], w_ref[...], preferred_element_type=jnp.float32)
    o_ref[...] = (acc + b_ref[...]).astype(o_ref.dtype)


def _linear_kernel_f32_accum(x_ref, w_ref, b_ref, o_ref):
    # f32 output: the output block is resident across k, accumulate in place.
    k = pl.program_id(2)

    @pl.when(k == 0)
    def _():
        o_ref[...] = jnp.broadcast_to(b_ref[...], o_ref.shape)

    o_ref[...] += jnp.dot(x_ref[...], w_ref[...],
                          preferred_element_type=jnp.float32)


def _linear_kernel_acc_scratch(x_ref, w_ref, b_ref, o_ref, acc_ref):
    # Non-f32 output: f32 VMEM accumulator, seeded with the bias at k == 0.
    k = pl.program_id(2)

    @pl.when(k == 0)
    def _():
        acc_ref[...] = jnp.broadcast_to(b_ref[...], acc_ref.shape)

    acc_ref[...] += jnp.dot(x_ref[...], w_ref[...],
                            preferred_element_type=jnp.float32)

    @pl.when(k == pl.num_programs(2) - 1)
    def _():
        o_ref[...] = acc_ref[...].astype(o_ref.dtype)


# ----------------------------- wrappers -------------------------------------


def prepare_mlp_embedding_params(w_t, b, *, tn_cap=_TN_CAP, tk_cap=_TK_CAP):
    """Pad + cast the nn.Linear parameters ONCE (hoisted out of the forward).

    w_t : [F_in, F_out]  (transpose of PyTorch nn.Linear.weight [F_out, F_in])
    b   : [F_out] or [1, F_out]
    Returns (w_p, b_p): bf16 weight [K_pad, N_pad], f32 bias [1, N_pad].
    """
    f_in, f_out = w_t.shape
    k_pad = _padded_dim(f_in, tk_cap)
    n_pad = _padded_dim(f_out, tn_cap)
    w_p = jnp.pad(jnp.asarray(w_t, jnp.float32),
                  ((0, k_pad - f_in), (0, n_pad - f_out))).astype(jnp.bfloat16)
    b_p = jnp.pad(jnp.reshape(jnp.asarray(b, jnp.float32), (1, f_out)),
                  ((0, 0), (0, n_pad - f_out)))
    return w_p, b_p


@functools.partial(
    jax.jit,
    static_argnames=("f_out", "out_dtype", "tm_cap", "tn_cap", "tk_cap"))
def mlp_embedding_forward_prepared(x, w_p, b_p, *, f_out, out_dtype=None,
                                   tm_cap=_TM_CAP, tn_cap=_TN_CAP,
                                   tk_cap=_TK_CAP):
    """y = x @ W^T + b using pre-padded bf16 weight w_p and f32 bias b_p."""
    batch, f_in = x.shape
    k_pad, n_pad = w_p.shape
    out_dtype = jnp.dtype(out_dtype if out_dtype is not None else x.dtype)

    # ---- tile selection (all dims stay 128-aligned, tiles divide the pads) --
    if batch <= tm_cap:
        tm = m_pad = max(16, _round_up(batch, 16))     # single batch tile
    else:
        m_pad = _padded_dim(batch, tm_cap)
        tm = _best_tile(m_pad, tm_cap)
    tk = _best_tile(k_pad, tk_cap)
    tn = _best_tile(n_pad, tn_cap)
    # Give the parallel j axis >= 2 tiles when possible so both v7x
    # TensorCores get work (one extra cheap grid step on v5e/v6e, same bytes).
    if n_pad == tn and n_pad % 256 == 0:
        tn //= 2
    num_i, num_j, num_k = m_pad // tm, n_pad // tn, k_pad // tk

    # ---- activation: pad only if needed, cast to bf16 for the MXU ----------
    if (batch, f_in) != (m_pad, k_pad):
        x = jnp.pad(x, ((0, m_pad - batch), (0, k_pad - f_in)))
    x_p = x.astype(jnp.bfloat16)

    out_itemsize = jnp.dtype(out_dtype).itemsize
    cost = pl.CostEstimate(
        flops=2 * m_pad * n_pad * k_pad,
        transcendentals=0,
        bytes_accessed=(x_p.size * 2 + w_p.size * 2 + b_p.size * 4
                        + m_pad * n_pad * out_itemsize))

    if num_k == 1:
        kernel = _linear_kernel_single_k
        grid = (num_i, num_j)
        in_specs = [
            pl.BlockSpec((tm, tk), lambda i, j: (i, 0)),
            pl.BlockSpec((tk, tn), lambda i, j: (0, j)),
            pl.BlockSpec((1, tn), lambda i, j: (0, j)),
        ]
        out_specs = pl.BlockSpec((tm, tn), lambda i, j: (i, j))
        scratch_shapes = []
        semantics = ("parallel", "parallel")
    else:
        grid = (num_i, num_j, num_k)
        in_specs = [
            pl.BlockSpec((tm, tk), lambda i, j, k: (i, k)),
            pl.BlockSpec((tk, tn), lambda i, j, k: (k, j)),
            pl.BlockSpec((1, tn), lambda i, j, k: (0, j)),
        ]
        out_specs = pl.BlockSpec((tm, tn), lambda i, j, k: (i, j))
        semantics = ("parallel", "parallel", "arbitrary")
        if out_dtype == jnp.float32:
            kernel = _linear_kernel_f32_accum
            scratch_shapes = []
        else:
            kernel = _linear_kernel_acc_scratch
            scratch_shapes = [pltpu.VMEM((tm, tn), jnp.float32)]

    # Double-buffered inputs/outputs + optional f32 accumulator; keep the
    # explicit limit <= 48 MiB so it is always valid on v7x (64 MiB/TC).
    footprint = 2 * (tm * tk * 2 + tk * tn * 2 + tn * 4
                     + tm * tn * out_itemsize)
    if scratch_shapes:
        footprint += tm * tn * 4
    vmem_limit = min(48 * _MIB, max(32 * _MIB, (3 * footprint) // 2))

    out_p = pl.pallas_call(
        kernel,
        out_shape=jax.ShapeDtypeStruct((m_pad, n_pad), out_dtype),
        grid_spec=pltpu.PrefetchScalarGridSpec(
            num_scalar_prefetch=0,
            grid=grid,
            in_specs=in_specs,
            out_specs=out_specs,
            scratch_shapes=scratch_shapes),
        compiler_params=pltpu.CompilerParams(
            dimension_semantics=semantics,
            vmem_limit_bytes=vmem_limit),
        cost_estimate=cost,
    )(x_p, w_p, b_p)

    return out_p[:batch, :f_out]


def mlp_embedding_forward(x, w_t, b, *, out_dtype=None, tm_cap=_TM_CAP,
                          tn_cap=_TN_CAP, tk_cap=_TK_CAP):
    """One-shot forward (re-pads the weight on every call).  For repeated use,
    call prepare_mlp_embedding_params once and reuse (w_p, b_p)."""
    w_p, b_p = prepare_mlp_embedding_params(w_t, b, tn_cap=tn_cap,
                                            tk_cap=tk_cap)
    return mlp_embedding_forward_prepared(
        x, w_p, b_p, f_out=w_t.shape[1], out_dtype=out_dtype,
        tm_cap=tm_cap, tn_cap=tn_cap, tk_cap=tk_cap)


# ----------------------------- demo / tests ---------------------------------

if __name__ == "__main__":
    key = jax.random.PRNGKey(0)

    def make_linear(kw, kb, f_in, f_out):
        # Deterministic nn.Linear-style init; PyTorch weight is [F_out, F_in].
        bound = 1.0 / (f_in ** 0.5)
        w = jax.random.uniform(kw, (f_out, f_in), minval=-bound, maxval=bound,
                               dtype=jnp.float32)
        b = jax.random.uniform(kb, (f_out,), minval=-bound, maxval=bound,
                               dtype=jnp.float32)
        return jnp.transpose(w), b        # kernel wants [F_in, F_out]

    def bf16_ref(x, w_t, b, out_dtype=jnp.float32):
        return (jnp.dot(x.astype(jnp.bfloat16), w_t.astype(jnp.bfloat16),
                        preferred_element_type=jnp.float32)
                + b[None, :]).astype(out_dtype)

    # --- test 1: small embedding head, single K step, hoisted params --------
    B, F_in, F_out = 8, 32, 64
    kx, kw, kb, key = jax.random.split(key, 4)
    x = jax.random.normal(kx, (B, F_in), dtype=jnp.float32)
    w_t, b = make_linear(kw, kb, F_in, F_out)
    w_p, b_p = prepare_mlp_embedding_params(w_t, b)   # pad/cast weight ONCE
    y = jax.block_until_ready(
        mlp_embedding_forward_prepared(x, w_p, b_p, f_out=F_out))
    assert y.shape == (B, F_out) and y.dtype == x.dtype
    assert jnp.allclose(y, bf16_ref(x, w_t, b), atol=1e-3, rtol=1e-3)
    assert jnp.allclose(y, x @ w_t + b[None, :], atol=3e-2, rtol=3e-2)

    # --- test 2: multi-K reduction, f32 output accumulated in place ---------
    B2, F_in2, F_out2 = 96, 384, 320
    kx2, kw2, kb2, key = jax.random.split(key, 4)
    x2 = jax.random.normal(kx2, (B2, F_in2), dtype=jnp.float32)
    w_t2, b2 = make_linear(kw2, kb2, F_in2, F_out2)
    y2 = jax.block_until_ready(
        mlp_embedding_forward(x2, w_t2, b2, tk_cap=128))   # forces 3 K steps
    assert y2.shape == (B2, F_out2)
    assert jnp.allclose(y2, bf16_ref(x2, w_t2, b2), atol=1e-3, rtol=1e-3)
    assert jnp.allclose(y2, x2 @ w_t2 + b2[None, :], atol=3e-2, rtol=3e-2)

    # --- test 3: bf16 output, multiple batch / N tiles, scratch accumulator -
    B3, F_in3, F_out3 = 200, 384, 256
    kx3, kw3, kb3, key = jax.random.split(key, 4)
    x3 = jax.random.normal(kx3, (B3, F_in3), dtype=jnp.float32)
    w_t3, b3 = make_linear(kw3, kb3, F_in3, F_out3)
    y3 = jax.block_until_ready(
        mlp_embedding_forward(x3, w_t3, b3, out_dtype=jnp.bfloat16,
                              tm_cap=128, tk_cap=128))
    assert y3.shape == (B3, F_out3) and y3.dtype == jnp.bfloat16
    ref3 = bf16_ref(x3, w_t3, b3, out_dtype=jnp.bfloat16)
    assert jnp.allclose(y3.astype(jnp.float32), ref3.astype(jnp.float32),
                        atol=2e-2, rtol=2e-2)

    print("KERNEL_OK")
</pallas_src>

<mosaic_0001>
module attributes {stable_mosaic.version = 11 : i64} {
  func.func @_linear_kernel_single_k(%arg0: i32, %arg1: i32, %arg2: memref<16x128xbf16, #tpu.memory_space<vmem>>, %arg3: memref<128x128xbf16, #tpu.memory_space<vmem>>, %arg4: memref<1x128xf32, #tpu.memory_space<vmem>>, %arg5: memref<16x128xf32, #tpu.memory_space<vmem>>) attributes {dimension_semantics = [#tpu.dimension_semantics<parallel>, #tpu.dimension_semantics<parallel>], iteration_bounds = array<i64: 1, 1>, scalar_prefetch = 0 : i64, scratch_operands = 0 : i64, tpu.core_type = #tpu.core_type<tc>, window_params = [{transform_indices = @transform_0, window_bounds = array<i64: 16, 128>}, {transform_indices = @transform_1, window_bounds = array<i64: 128, 128>}, {transform_indices = @transform_2, window_bounds = array<i64: 1, 128>}, {transform_indices = @transform_3, window_bounds = array<i64: 16, 128>}]} {
    %c0 = arith.constant 0 : index
    %c0_0 = arith.constant 0 : index
    %0 = vector.load %arg2[%c0, %c0_0] : memref<16x128xbf16, #tpu.memory_space<vmem>>, vector<16x128xbf16>
    %c0_1 = arith.constant 0 : index
    %c0_2 = arith.constant 0 : index
    %1 = vector.load %arg3[%c0_1, %c0_2] : memref<128x128xbf16, #tpu.memory_space<vmem>>, vector<128x128xbf16>
    %cst = arith.constant dense<0.000000e+00> : vector<16x128xf32>
    %2 = tpu.matmul %0, %1, %cst {dimension_numbers = #tpu.dot_dimension_numbers<[1], [0], [0], [1], [0, 0, 1, 1], [], []>} : vector<16x128xbf16>, vector<128x128xbf16>, vector<16x128xf32> -> vector<16x128xf32>
    %c0_3 = arith.constant 0 : index
    %c0_4 = arith.constant 0 : index
    %3 = vector.load %arg4[%c0_3, %c0_4] : memref<1x128xf32, #tpu.memory_space<vmem>>, vector<1x128xf32>
    %4 = vector.broadcast %3 : vector<1x128xf32> to vector<16x128xf32>
    %5 = arith.addf %2, %4 : vector<16x128xf32>
    %c0_5 = arith.constant 0 : index
    %c0_6 = arith.constant 0 : index
    %6 = vector.load %arg5[%c0_5, %c0_6] : memref<16x128xf32, #tpu.memory_space<vmem>>, vector<16x128xf32>
    tpu.vector_store %arg5[%c0_5, %c0_6], %5 {strides = array<i32>} : memref<16x128xf32, #tpu.memory_space<vmem>>, vector<16x128xf32>,
    return
  }
  func.func @transform_0(%arg0: i32, %arg1: i32) -> (i32, i32) {
    %c0_i32 = arith.constant 0 : i32
    %c0_i32_0 = arith.constant 0 : i32
    return %arg0, %c0_i32 : i32, i32
  }
  func.func @transform_1(%arg0: i32, %arg1: i32) -> (i32, i32) {
    %c0_i32 = arith.constant 0 : i32
    %c0_i32_0 = arith.constant 0 : i32
    return %c0_i32, %arg1 : i32, i32
  }
  func.func @transform_2(%arg0: i32, %arg1: i32) -> (i32, i32) {
    %c0_i32 = arith.constant 0 : i32
    %c0_i32_0 = arith.constant 0 : i32
    return %c0_i32, %arg1 : i32, i32
  }
  func.func @transform_3(%arg0: i32, %arg1: i32) -> (i32, i32) {
    %c0_i32 = arith.constant 0 : i32
    return %arg0, %arg1 : i32, i32
  }
}

</mosaic_0001>

<llo_original>
// kernel: mlp_embedding_forward_prepared.1
$region0: #{mlp_embedding_forward_prepared.1}
  #allocation0 [shape = 'u32[]', space=smem, size = 0x4, offset = 0x4, fixed_abs, tag = 'smem constant byte address 0x4 - core index']
  #allocation1 [shape = 'u32[144,128]{1,0:T(1,128)}', space=vmem, size = 0x12000, scoped, tag = 'internal scratch']
  %s0 = inlined_call_operand.vmem [shape: bf16[16,128], index: 0, kind: input, shape index: {}]
  %s1 = inlined_call_operand.hbm [shape: bf16[128,128], index: 1, kind: input, shape index: {}]
  %s2 = inlined_call_operand.vmem [shape: f32[1,128], index: 2, kind: input, shape index: {}]
  %s3 = inlined_call_operand.vmem [shape: f32[16,128], index: 3, kind: output, shape index: {}]
  %s4 = sld [smem:[#allocation0]]
  $region26: #{mlp_embedding_forward_prepared.1} parent=0
    _
  %s6 = ssub.s32 1, %s4
  %s7 = scalar_select 0, %s6, %s4
  $region1: #{mlp_embedding_forward_prepared.1} parent=0
    #allocation2 [shape = 'u8[32768]{0}', space=vmem, size = 0x8000, scoped, tag = 'input window, operand 1, single buffered']
    #allocation3 [shape = 's32[1]{0}', space=sflag, size = 0x4, scoped, tag = 'scoped memory for mlp_embedding_forward_prepared.1']
    %8 = vsyncpa [#allocation3], 0
    // Predicated region
    $region2: #{mlp_embedding_forward_prepared.1} parent=1 // pred_check
      _
    $region3: #{mlp_embedding_forward_prepared.1} parent=1 // pred_check_branch
      %10 = sbr.rel (0) target = $region5
    $region4: #{mlp_embedding_forward_prepared.1} parent=1 // pred_region
      _
    $region5: #{mlp_embedding_forward_prepared.1} parent=1 // pred_fallthru
      _
    // Predicated region
    $region6: #{mlp_embedding_forward_prepared.1} parent=1 // pred_check
      _
    $region7: #{mlp_embedding_forward_prepared.1} parent=1 // pred_check_branch
      %12 = sbr.rel (0) target = $region9
    $region8: #{mlp_embedding_forward_prepared.1} parent=1 // pred_region
      %s14 = ssub.s32 1024, 1024
      %15 = vsyncadd [#allocation3], %s14
      %s16 = sshll.u32 [#allocation2], 4
      %s17 = int_to_ptr.vmem [resolvable:$true] %s16
      %22 = dma.hbm_to_vmem [thread:$0]  %s1, 1024, %s17, [#allocation3], 64, 64, 4
    $region9: #{mlp_embedding_forward_prepared.1} parent=1 // pred_fallthru
      _
    // Predicated region
    $region10: #{mlp_embedding_forward_prepared.1} parent=1 // pred_check
      _
    $region11: #{mlp_embedding_forward_prepared.1} parent=1 // pred_check_branch
      %24 = sbr.rel (0) target = $region13
    $region12: #{mlp_embedding_forward_prepared.1} parent=1 // pred_region
      _
    $region13: #{mlp_embedding_forward_prepared.1} parent=1 // pred_fallthru
      _
    // Predicated region
    $region14: #{mlp_embedding_forward_prepared.1} parent=1 // pred_check
      _
    $region15: #{mlp_embedding_forward_prepared.1} parent=1 // pred_check_branch
      %26 = sbr.rel (0) target = $region17
    $region16: #{mlp_embedding_forward_prepared.1} parent=1 // pred_region
      %27 = dma.done [#allocation3], 1024
    $region17: #{mlp_embedding_forward_prepared.1} parent=1 // pred_fallthru
      _
    %v29 = vld [vmem:[%s0] sm:$0xf]
    %v30 = vld [vmem:[%s0 + $0x4] sm:$0xf]
    %v31 = vld [vmem:[#allocation2] sm:$0xf]
    %v32 = vld [vmem:[#allocation2 + $0x4] sm:$0xf]
    %v33 = vld [vmem:[#allocation2 + $0x8] sm:$0xf]
    %v34 = vld [vmem:[#allocation2 + $0xc] sm:$0xf]
    %v35 = vld [vmem:[#allocation2 + $0x10] sm:$0xf]
    %v36 = vld [vmem:[#allocation2 + $0x14] sm:$0xf]
    %v37 = vld [vmem:[#allocation2 + $0x18] sm:$0xf]
    %v38 = vld [vmem:[#allocation2 + $0x1c] sm:$0xf]
    %v39 = vld [vmem:[#allocation2 + $0x20] sm:$0xf]
    %v40 = vld [vmem:[#allocation2 + $0x24] sm:$0xf]
    %v41 = vld [vmem:[#allocation2 + $0x28] sm:$0xf]
    %v42 = vld [vmem:[#allocation2 + $0x2c] sm:$0xf]
    %v43 = vld [vmem:[#allocation2 + $0x30] sm:$0xf]
    %v44 = vld [vmem:[#allocation2 + $0x34] sm:$0xf]
    %v45 = vld [vmem:[#allocation2 + $0x38] sm:$0xf]
    %v46 = vld [vmem:[#allocation2 + $0x3c] sm:$0xf]
    %v47 = vld [vmem:[%s2] sm:$0x1]
    %v49 = vlaneseq
    %v50 = vshrl.u32 %v49, 7
    %v51 = vsub.s32 0, %v50
    %v52 = vrot.slane %v47, %v51
    %v56 = vunpack.c.l.b16 %v29
    %v57 = vunpack.c.l.b16 %v30
    %v58 = vpack.c.b16 %v57, %v56
    %v76 = vunpack.c.l.b16 %v31
    %v77 = vunpack.c.l.b16 %v32
    %v78 = vunpack.c.l.b16 %v33
    %v79 = vunpack.c.l.b16 %v34
    %v80 = vunpack.c.l.b16 %v35
    %v81 = vunpack.c.l.b16 %v36
    %v82 = vunpack.c.l.b16 %v37
    %v83 = vunpack.c.l.b16 %v38
    %v84 = vunpack.c.l.b16 %v39
    %v85 = vunpack.c.l.b16 %v40
    %v86 = vunpack.c.l.b16 %v41
    %v87 = vunpack.c.l.b16 %v42
    %v88 = vunpack.c.l.b16 %v43
    %v89 = vunpack.c.l.b16 %v44
    %v90 = vunpack.c.l.b16 %v45
    %v91 = vunpack.c.l.b16 %v46
    %v92 = vpack.c.b16 %v77, %v76
    %v93 = vpack.c.b16 %v79, %v78
    %v94 = vpack.c.b16 %v81, %v80
    %v95 = vpack.c.b16 %v83, %v82
    %v96 = vpack.c.b16 %v85, %v84
    %v97 = vpack.c.b16 %v87, %v86
    %v98 = vpack.c.b16 %v89, %v88
    %v99 = vpack.c.b16 %v91, %v90
    %108 = vmatprep.subr.bf16.mxu0 0
    %109 = vmatpush1.bf16.msra.mxu0 %v99
    %110 = vmatprep.subr.bf16.mxu0 0
    %111 = vmatpush1.bf16.msra.mxu0 %v98
    %112 = vmatprep.subr.bf16.mxu0 0
    %113 = vmatpush1.bf16.msra.mxu0 %v97
    %114 = vmatprep.subr.bf16.mxu0 0
    %115 = vmatpush1.bf16.msra.mxu0 %v96
    %116 = vmatprep.subr.bf16.mxu0 0
    %117 = vmatpush1.bf16.msra.mxu0 %v95
    %118 = vmatprep.subr.bf16.mxu0 0
    %119 = vmatpush1.bf16.msra.mxu0 %v94
    %120 = vmatprep.subr.bf16.mxu0 0
    %121 = vmatpush1.bf16.msra.mxu0 %v93
    %122 = vmatprep.subr.bf16.mxu0 0
    %123 = vmatpush1.bf16.msra.mxu0 %v92
    %124 = vmatprep.subr.bf16.mxu0 0
    %125 = vmatpush2.bf16.msra.mxu0 0
    %126 = vmatprep.subr.bf16.mxu0 0
    %127 = vmatpush2.bf16.msra.mxu0 0
    %128 = vmatprep.subr.bf16.mxu0 0
    %129 = vmatpush2.bf16.msra.mxu0 0
    %130 = vmatprep.subr.bf16.mxu0 0
    %131 = vmatpush2.bf16.msra.mxu0 0
    %132 = vmatprep.subr.bf16.mxu0 0
    %133 = vmatpush2.bf16.msra.mxu0 0
    %134 = vmatprep.subr.bf16.mxu0 0
    %135 = vmatpush2.bf16.msra.mxu0 0
    %136 = vmatprep.subr.bf16.mxu0 0
    %137 = vmatpush2.bf16.msra.mxu0 0
    %138 = vmatprep.subr.bf16.mxu0 0
    %139 = vmatpush2.bf16.msra.mxu0 0
    %140 = vmatprep.mubr.bf16.mxu0 0
    %141 = vmatmul.mubr.bf16.gmra.mxu0 %v58
    %v142 = vpop.f32.mrf.mxu0
    %v143 = vadd.f32 %v52, %v142
    %v144 = vpop.f32.mrf.mxu0
    %v145 = vpop.f32.mrf.mxu0
    %v146 = vadd.f32 %v52, %v145
    %v147 = vpop.f32.mrf.mxu0
    %148 = vdwg.mxu0
    %149 = vst [vmem:[%s3] sm:$0xff] %v143
    %150 = vst [vmem:[%s3 + $0x8] sm:$0xff] %v146
    // Predicated region
    $region18: #{mlp_embedding_forward_prepared.1} parent=1 // pred_check
      _
    $region19: #{mlp_embedding_forward_prepared.1} parent=1 // pred_check_branch
      %152 = sbr.rel (0) target = $region21
    $region20: #{mlp_embedding_forward_prepared.1} parent=1 // pred_region
      _
    $region21: #{mlp_embedding_forward_prepared.1} parent=1 // pred_fallthru
      _
    // Predicated region
    $region22: #{mlp_embedding_forward_prepared.1} parent=1 // pred_check
      _
    $region23: #{mlp_embedding_forward_prepared.1} parent=1 // pred_check_branch
      %154 = sbr.rel (0) target = $region25
    $region24: #{mlp_embedding_forward_prepared.1} parent=1 // pred_region
      _
    $region25: #{mlp_embedding_forward_prepared.1} parent=1 // pred_fallthru
      _
    %155 = vsyncpa [#allocation3], 1

</llo_original>
